<compile_context>
chip_gen: v5e
topology: v5e:2x2
jax: 0.10.0
libtpu: 0.0.40
codegen_flags: <defaults>
</compile_context>

<pallas_src>
import functools

import jax
import jax.numpy as jnp
from jax import lax
from jax.experimental import pallas as pl
from jax.experimental.pallas import tpu as pltpu


def _round_up(x, m):
    return ((x + m - 1) // m) * m


def _collision_kernel(cloth_ref, fac_ref, loss_ref, minp_ref, num_ref, *, eps, corr_eps):
    """One (example, node-tile, face-tile) grid step.

    cloth_ref: (1, 9, Nt)  coords-major cloth tile, nodes on lanes:
               rows 0-2 curr xyz, row 3 = +1, row 4 = ||curr||^2,
               rows 5-7 pred xyz, row 8 = -1
    fac_ref:   (1, Ft, 9)  per-face features, faces on sublanes:
               cols 0-2 = -2*centroid_curr, col 3 = ||centroid_curr||^2, col 4 = 1,
               cols 5-7 = unit face normal (next), col 8 = centroid_next . normal
    loss_ref:  (1, 1, 1)   per-example loss accumulator (resident across node/face tiles)
    minp_ref:  (1, Nt)     running min squared node->centroid distance over face tiles
    num_ref:   (1, Nt)     running sum of relu(eps - dist)^3 over faces achieving that min
    """
    i = pl.program_id(1)            # node-tile index
    j = pl.program_id(2)            # face-tile index (reduction axis, innermost)
    nj = pl.num_programs(2)

    cloth = cloth_ref[0]            # (9, Nt)
    fac = fac_ref[0]                # (Ft, 9)

    xc = cloth[0:5, :]              # (5, Nt) [x, y, z, 1, ||x||^2]   (current positions)
    xn = cloth[5:9, :]              # (4, Nt) [x, y, z, -1]           (predicted positions)
    fc = fac[:, 0:5]                # (Ft, 5) [-2c, ||c||^2, 1]
    fn = fac[:, 5:9]                # (Ft, 4) [n, c_next . n]

    # d2[f, n]   = ||x_curr_n - centroid_curr_f||^2      (single K=5 MXU matmul)
    # dist[f, n] = x_pred_n . n_f - centroid_next_f . n_f (single K=4 MXU matmul)
    d2 = jnp.dot(fc, xc, preferred_element_type=jnp.float32)      # (Ft, Nt)
    dist = jnp.dot(fn, xn, preferred_element_type=jnp.float32)    # (Ft, Nt)

    r = jnp.maximum(eps - dist, 0.0)
    relu3 = r * r * r                                             # relu(eps - dist)^3

    blk_min = jnp.min(d2, axis=0, keepdims=True)                  # (1, Nt)
    blk_num = jnp.sum(jnp.where(d2 <= blk_min, relu3, 0.0),
                      axis=0, keepdims=True)                      # (1, Nt)

    @pl.when(j == 0)
    def _():
        minp_ref[...] = jnp.full_like(minp_ref, jnp.inf)
        num_ref[...] = jnp.zeros_like(num_ref)

    @pl.when(jnp.logical_and(i == 0, j == 0))
    def _():
        loss_ref[...] = jnp.zeros_like(loss_ref)

    # Online argmin merge across face tiles: a strictly smaller block-min replaces the
    # accumulated relu^3 sum; an exact tie adds (all faces achieving the global min count).
    run_min = minp_ref[...]
    run_num = num_ref[...]
    new_num = jnp.where(blk_min < run_min, blk_num,
                        jnp.where(blk_min == run_min, run_num + blk_num, run_num))
    minp_ref[...] = jnp.minimum(run_min, blk_min)
    num_ref[...] = new_num

    @pl.when(j == nj - 1)
    def _():
        # Correspondence filter on the true squared distance to the closest centroid,
        # then accumulate this node tile's contribution into the per-example loss.
        per_node = jnp.where(minp_ref[...] <= corr_eps * corr_eps, num_ref[...], 0.0)  # (1, Nt)
        loss_ref[0] = loss_ref[0] + jnp.sum(per_node, axis=1, keepdims=True)           # (1, 1)


def collision_penalty(cloth_curr, cloth_next, obstacle_curr, obstacle_next, faces,
                      *, eps, correspondence_eps, weight,
                      node_tile=512, face_tile=2048):
    """Returns dict(loss=..., weight=...) matching Criterion.forward semantics."""
    B, N, _ = cloth_curr.shape
    _, F, _ = faces.shape
    f32 = jnp.float32
    BIG = 1.0e6          # sentinel magnitude: keeps padded nodes/faces out of the loss

    # ---- tile sizes: nodes on lanes (128 granule), faces on sublanes (8 granule) ----
    Nt = min(_round_up(node_tile, 128), _round_up(N, 128))
    Ft = min(_round_up(face_tile, 8), _round_up(F, 8))
    N_pad = _round_up(N, Nt)
    F_pad = _round_up(F, Ft)
    NT = N_pad // Nt
    FT = F_pad // Ft

    # ---- glue: cloth packed coords-major (B, 9, N_pad), nodes on lanes ----
    cc3 = jnp.transpose(cloth_curr.astype(f32), (0, 2, 1))        # (B, 3, N)
    cn3 = jnp.transpose(cloth_next.astype(f32), (0, 2, 1))        # (B, 3, N)
    x2 = jnp.sum(cc3 * cc3, axis=1, keepdims=True)                # (B, 1, N)
    one = jnp.ones((B, 1, N), f32)
    cloth_cm = jnp.concatenate([cc3, one, x2, cn3, -one], axis=1)  # (B, 9, N)
    if N_pad != N:
        p = N_pad - N
        pad_cols = jnp.concatenate([
            jnp.full((B, 3, p), BIG, f32),                         # curr pos far away so
            jnp.ones((B, 1, p), f32),                              # min d2 >> corr_eps^2
            jnp.full((B, 1, p), 3.0 * BIG * BIG, f32),             # ||curr||^2
            jnp.zeros((B, 3, p), f32),                             # pred pos (unused)
            jnp.full((B, 1, p), -1.0, f32),
        ], axis=1)                                                 # (B, 9, p)
        cloth_cm = jnp.concatenate([cloth_cm, pad_cols], axis=2)   # (B, 9, N_pad)

    # ---- glue: per-face features (B, F_pad, 9), faces on sublanes ----
    bidx = jnp.arange(B)[:, None, None]
    tri_c = obstacle_curr.astype(f32)[bidx, faces]                 # (B, F, 3verts, 3coords)
    tri_n = obstacle_next.astype(f32)[bidx, faces]
    cc = jnp.mean(tri_c, axis=2)                                   # (B, F, 3) centroid (curr)
    cn = jnp.mean(tri_n, axis=2)                                   # (B, F, 3) centroid (next)
    e1 = tri_n[:, :, 1, :] - tri_n[:, :, 0, :]
    e2 = tri_n[:, :, 2, :] - tri_n[:, :, 0, :]
    nrm = jnp.cross(e1, e2)
    nrm = nrm * lax.rsqrt(jnp.sum(nrm * nrm, axis=-1, keepdims=True) + 1e-12)
    c2 = jnp.sum(cc * cc, axis=-1, keepdims=True)                  # (B, F, 1)
    pd = jnp.sum(cn * nrm, axis=-1, keepdims=True)                 # (B, F, 1)
    fac_feat = jnp.concatenate([-2.0 * cc, c2, jnp.ones_like(c2), nrm, pd], axis=-1)  # (B,F,9)
    if F_pad != F:
        p = F_pad - F
        # Sentinel face: centroid at (-BIG,-BIG,-BIG) (never the argmin for real or padded
        # nodes), normal (1,0,0) with plane offset -BIG so dist ~ +BIG >> eps (relu^3 = 0).
        sent = jnp.array([2.0 * BIG, 2.0 * BIG, 2.0 * BIG, 3.0 * BIG * BIG, 1.0,
                          1.0, 0.0, 0.0, -BIG], f32)
        fac_feat = jnp.concatenate(
            [fac_feat, jnp.broadcast_to(sent[None, None, :], (B, p, 9))], axis=1)

    # ---- VMEM budget: double-buffered blocks + scratch + (Ft, Nt) intermediates headroom ----
    cloth_blk = 16 * Nt * 4                      # 9 sublanes pad to 16
    fac_blk = Ft * 128 * 4                       # 9 lanes pad to 128
    scratch_b = 2 * 8 * Nt * 4                   # two (1, Nt) carries, sublane-padded
    temps = 10 * Ft * Nt * 4                     # ~(Ft, Nt) f32 intermediates headroom
    vmem_limit = int(min(max(2 * (cloth_blk + fac_blk) + scratch_b + temps + (4 << 20),
                             32 << 20),
                         56 << 20))              # headroom under v7x's 64 MiB physical VMEM

    kernel = functools.partial(_collision_kernel,
                               eps=float(eps),
                               corr_eps=float(correspondence_eps))

    per_example = pl.pallas_call(
        kernel,
        out_shape=jax.ShapeDtypeStruct((B, 1, 1), f32),
        grid_spec=pltpu.PrefetchScalarGridSpec(
            num_scalar_prefetch=0,
            grid=(B, NT, FT),
            in_specs=[pl.BlockSpec((1, 9, Nt), lambda b, i, j: (b, 0, i)),
                      pl.BlockSpec((1, Ft, 9), lambda b, i, j: (b, j, 0))],
            out_specs=pl.BlockSpec((1, 1, 1), lambda b, i, j: (b, 0, 0)),
            scratch_shapes=[pltpu.VMEM((1, Nt), f32),     # running min d2
                            pltpu.VMEM((1, Nt), f32)]),   # running relu^3 sum
        compiler_params=pltpu.CompilerParams(
            dimension_semantics=("parallel", "arbitrary", "arbitrary"),
            vmem_limit_bytes=vmem_limit),
    )(cloth_cm, fac_feat)

    loss = jnp.sum(per_example[:, 0, 0]) / B * weight     # sum(loss_list) / B * weight
    return dict(loss=loss, weight=weight)


if __name__ == "__main__":
    key = jax.random.PRNGKey(0)
    # batch, cloth nodes, obstacle verts, obstacle faces (N, F chosen to exercise padding)
    B, N, M, F = 2, 120, 32, 60
    k1, k2, k3, k4, k5 = jax.random.split(key, 5)

    cloth_curr = jax.random.uniform(k1, (B, N, 3), jnp.float32)
    cloth_next = cloth_curr + 0.02 * jax.random.normal(k2, (B, N, 3), jnp.float32)
    obstacle_curr = jax.random.uniform(k3, (B, M, 3), jnp.float32)
    obstacle_next = obstacle_curr + 0.02 * jax.random.normal(k4, (B, M, 3), jnp.float32)
    faces = jax.random.randint(k5, (B, F, 3), 0, M, dtype=jnp.int32)

    out = collision_penalty(cloth_curr, cloth_next, obstacle_curr, obstacle_next, faces,
                            eps=0.1, correspondence_eps=0.5, weight=1.0)
    jax.block_until_ready(out["loss"])
    print("KERNEL_OK")
</pallas_src>

<mosaic_0001>
module attributes {stable_mosaic.version = 11 : i64} {
  func.func @_collision_kernel(%arg0: i32, %arg1: i32, %arg2: i32, %arg3: memref<1x9x128xf32, #tpu.memory_space<vmem>>, %arg4: memref<1x64x9xf32, #tpu.memory_space<vmem>>, %arg5: memref<1x1x1xf32, #tpu.memory_space<vmem>>, %arg6: memref<1x128xf32, #tpu.memory_space<vmem>>, %arg7: memref<1x128xf32, #tpu.memory_space<vmem>>) attributes {dimension_semantics = [#tpu.dimension_semantics<parallel>, #tpu.dimension_semantics<arbitrary>, #tpu.dimension_semantics<arbitrary>], iteration_bounds = array<i64: 2, 1, 1>, scalar_prefetch = 0 : i64, scratch_operands = 2 : i64, tpu.core_type = #tpu.core_type<tc>, window_params = [{transform_indices = @transform_0, window_bounds = array<i64: 1, 9, 128>}, {transform_indices = @transform_1, window_bounds = array<i64: 1, 64, 9>}, {transform_indices = @transform_2, window_bounds = array<i64: 1, 1, 1>}]} {
    %c0 = arith.constant 0 : index
    %c0_0 = arith.constant 0 : index
    %c0_1 = arith.constant 0 : index
    %0 = vector.load %arg3[%c0, %c0_0, %c0_1] : memref<1x9x128xf32, #tpu.memory_space<vmem>>, vector<1x9x128xf32>
    %1 = vector.shape_cast %0 : vector<1x9x128xf32> to vector<9x128xf32>
    %c0_2 = arith.constant 0 : index
    %c0_3 = arith.constant 0 : index
    %c0_4 = arith.constant 0 : index
    %2 = vector.load %arg4[%c0_2, %c0_3, %c0_4] : memref<1x64x9xf32, #tpu.memory_space<vmem>>, vector<1x64x9xf32>
    %3 = vector.shape_cast %2 : vector<1x64x9xf32> to vector<64x9xf32>
    %4 = vector.extract_strided_slice %1 {offsets = [0, 0], sizes = [5, 128], strides = [1, 1]} : vector<9x128xf32> to vector<5x128xf32>
    %5 = vector.extract_strided_slice %1 {offsets = [5, 0], sizes = [4, 128], strides = [1, 1]} : vector<9x128xf32> to vector<4x128xf32>
    %6 = vector.extract_strided_slice %3 {offsets = [0, 0], sizes = [64, 5], strides = [1, 1]} : vector<64x9xf32> to vector<64x5xf32>
    %7 = vector.extract_strided_slice %3 {offsets = [0, 5], sizes = [64, 4], strides = [1, 1]} : vector<64x9xf32> to vector<64x4xf32>
    %cst = arith.constant dense<0.000000e+00> : vector<64x128xf32>
    %8 = tpu.matmul %6, %4, %cst {dimension_numbers = #tpu.dot_dimension_numbers<[1], [0], [0], [1], [0, 0, 1, 1], [], []>} : vector<64x5xf32>, vector<5x128xf32>, vector<64x128xf32> -> vector<64x128xf32>
    %cst_5 = arith.constant dense<0.000000e+00> : vector<64x128xf32>
    %9 = tpu.matmul %7, %5, %cst_5 {dimension_numbers = #tpu.dot_dimension_numbers<[1], [0], [0], [1], [0, 0, 1, 1], [], []>} : vector<64x4xf32>, vector<4x128xf32>, vector<64x128xf32> -> vector<64x128xf32>
    %cst_6 = arith.constant 1.000000e-01 : f32
    %10 = vector.broadcast %cst_6 : f32 to vector<64x128xf32>
    %11 = arith.subf %10, %9 : vector<64x128xf32>
    %cst_7 = arith.constant 0.000000e+00 : f32
    %12 = vector.broadcast %cst_7 : f32 to vector<64x128xf32>
    %13 = arith.maximumf %11, %12 : vector<64x128xf32>
    %14 = arith.mulf %13, %13 : vector<64x128xf32>
    %15 = arith.mulf %14, %13 : vector<64x128xf32>
    %cst_8 = arith.constant dense<0x7F800000> : vector<128xf32>
    %16 = vector.multi_reduction <minimumf>, %8, %cst_8 [0] : vector<64x128xf32> to vector<128xf32>
    %17 = vector.shape_cast %16 : vector<128xf32> to vector<1x128xf32>
    %18 = vector.broadcast %17 : vector<1x128xf32> to vector<64x128xf32>
    %19 = arith.cmpf ole, %8, %18 : vector<64x128xf32>
    %cst_9 = arith.constant 0.000000e+00 : f32
    %20 = vector.broadcast %cst_9 : f32 to vector<64x128xf32>
    %21 = arith.select %19, %15, %20 : vector<64x128xi1>, vector<64x128xf32>
    %cst_10 = arith.constant dense<0.000000e+00> : vector<128xf32>
    %22 = vector.multi_reduction <add>, %21, %cst_10 [0] : vector<64x128xf32> to vector<128xf32>
    %23 = vector.shape_cast %22 : vector<128xf32> to vector<1x128xf32>
    %c0_i32 = arith.constant 0 : i32
    %24 = arith.cmpi eq, %arg2, %c0_i32 : i32
    %25 = arith.extui %24 : i1 to i32
    %c0_i32_11 = arith.constant 0 : i32
    %26 = arith.cmpi ne, %25, %c0_i32_11 : i32
    scf.if %26 {
      %cst_25 = arith.constant 0x7F800000 : f32
      %45 = vector.broadcast %cst_25 : f32 to vector<1x128xf32>
      %c0_26 = arith.constant 0 : index
      %c0_27 = arith.constant 0 : index
      %46 = vector.load %arg6[%c0_26, %c0_27] : memref<1x128xf32, #tpu.memory_space<vmem>>, vector<1x128xf32>
      tpu.vector_store %arg6[%c0_26, %c0_27], %45 {strides = array<i32>} : memref<1x128xf32, #tpu.memory_space<vmem>>, vector<1x128xf32>,
      %cst_28 = arith.constant 0.000000e+00 : f32
      %47 = vector.broadcast %cst_28 : f32 to vector<1x128xf32>
      %c0_29 = arith.constant 0 : index
      %c0_30 = arith.constant 0 : index
      %48 = vector.load %arg7[%c0_29, %c0_30] : memref<1x128xf32, #tpu.memory_space<vmem>>, vector<1x128xf32>
      tpu.vector_store %arg7[%c0_29, %c0_30], %47 {strides = array<i32>} : memref<1x128xf32, #tpu.memory_space<vmem>>, vector<1x128xf32>,
    } else {
    }
    %c0_i32_12 = arith.constant 0 : i32
    %27 = arith.cmpi eq, %arg1, %c0_i32_12 : i32
    %c0_i32_13 = arith.constant 0 : i32
    %28 = arith.cmpi eq, %arg2, %c0_i32_13 : i32
    %29 = arith.andi %27, %28 : i1
    %30 = arith.extui %29 : i1 to i32
    %c0_i32_14 = arith.constant 0 : i32
    %31 = arith.cmpi ne, %30, %c0_i32_14 : i32
    scf.if %31 {
      %cst_25 = arith.constant 0.000000e+00 : f32
      %45 = vector.broadcast %cst_25 : f32 to vector<1x1x1xf32>
      %c0_26 = arith.constant 0 : index
      %c0_27 = arith.constant 0 : index
      %c0_28 = arith.constant 0 : index
      %46 = vector.load %arg5[%c0_26, %c0_27, %c0_28] : memref<1x1x1xf32, #tpu.memory_space<vmem>>, vector<1x1x1xf32>
      tpu.vector_store %arg5[%c0_26, %c0_27, %c0_28], %45 {strides = array<i32>} : memref<1x1x1xf32, #tpu.memory_space<vmem>>, vector<1x1x1xf32>,
    } else {
    }
    %c0_15 = arith.constant 0 : index
    %c0_16 = arith.constant 0 : index
    %32 = vector.load %arg6[%c0_15, %c0_16] : memref<1x128xf32, #tpu.memory_space<vmem>>, vector<1x128xf32>
    %c0_17 = arith.constant 0 : index
    %c0_18 = arith.constant 0 : index
    %33 = vector.load %arg7[%c0_17, %c0_18] : memref<1x128xf32, #tpu.memory_space<vmem>>, vector<1x128xf32>
    %34 = arith.cmpf olt, %17, %32 : vector<1x128xf32>
    %35 = arith.cmpf oeq, %17, %32 : vector<1x128xf32>
    %36 = arith.addf %33, %23 : vector<1x128xf32>
    %37 = arith.select %35, %36, %33 : vector<1x128xi1>, vector<1x128xf32>
    %38 = arith.select %34, %23, %37 : vector<1x128xi1>, vector<1x128xf32>
    %39 = arith.minimumf %32, %17 : vector<1x128xf32>
    %c0_19 = arith.constant 0 : index
    %c0_20 = arith.constant 0 : index
    %40 = vector.load %arg6[%c0_19, %c0_20] : memref<1x128xf32, #tpu.memory_space<vmem>>, vector<1x128xf32>
    tpu.vector_store %arg6[%c0_19, %c0_20], %39 {strides = array<i32>} : memref<1x128xf32, #tpu.memory_space<vmem>>, vector<1x128xf32>,
    %c0_21 = arith.constant 0 : index
    %c0_22 = arith.constant 0 : index
    %41 = vector.load %arg7[%c0_21, %c0_22] : memref<1x128xf32, #tpu.memory_space<vmem>>, vector<1x128xf32>
    tpu.vector_store %arg7[%c0_21, %c0_22], %38 {strides = array<i32>} : memref<1x128xf32, #tpu.memory_space<vmem>>, vector<1x128xf32>,
    %c0_i32_23 = arith.constant 0 : i32
    %42 = arith.cmpi eq, %arg2, %c0_i32_23 : i32
    %43 = arith.extui %42 : i1 to i32
    %c0_i32_24 = arith.constant 0 : i32
    %44 = arith.cmpi ne, %43, %c0_i32_24 : i32
    scf.if %44 {
      %c0_25 = arith.constant 0 : index
      %c0_26 = arith.constant 0 : index
      %45 = vector.load %arg6[%c0_25, %c0_26] : memref<1x128xf32, #tpu.memory_space<vmem>>, vector<1x128xf32>
      %cst_27 = arith.constant 2.500000e-01 : f32
      %46 = vector.broadcast %cst_27 : f32 to vector<1x128xf32>
      %47 = arith.cmpf ole, %45, %46 : vector<1x128xf32>
      %c0_28 = arith.constant 0 : index
      %c0_29 = arith.constant 0 : index
      %48 = vector.load %arg7[%c0_28, %c0_29] : memref<1x128xf32, #tpu.memory_space<vmem>>, vector<1x128xf32>
      %cst_30 = arith.constant 0.000000e+00 : f32
      %49 = vector.broadcast %cst_30 : f32 to vector<1x128xf32>
      %50 = arith.select %47, %48, %49 : vector<1x128xi1>, vector<1x128xf32>
      %c0_31 = arith.constant 0 : index
      %c0_32 = arith.constant 0 : index
      %c0_33 = arith.constant 0 : index
      %51 = vector.load %arg5[%c0_31, %c0_32, %c0_33] : memref<1x1x1xf32, #tpu.memory_space<vmem>>, vector<1x1x1xf32>
      %52 = vector.shape_cast %51 : vector<1x1x1xf32> to vector<1x1xf32>
      %cst_34 = arith.constant dense<0.000000e+00> : vector<1xf32>
      %53 = vector.multi_reduction <add>, %50, %cst_34 [1] : vector<1x128xf32> to vector<1xf32>
      %54 = vector.shape_cast %53 : vector<1xf32> to vector<1x1xf32>
      %55 = arith.addf %52, %54 : vector<1x1xf32>
      %c0_35 = arith.constant 0 : index
      %c0_36 = arith.constant 0 : index
      %c0_37 = arith.constant 0 : index
      %56 = vector.load %arg5[%c0_35, %c0_36, %c0_37] : memref<1x1x1xf32, #tpu.memory_space<vmem>>, vector<1x1x1xf32>
      %57 = vector.shape_cast %56 : vector<1x1x1xf32> to vector<1x1xf32>
      %58 = vector.shape_cast %55 : vector<1x1xf32> to vector<1x1x1xf32>
      tpu.vector_store %arg5[%c0_35, %c0_36, %c0_37], %58 {strides = array<i32>} : memref<1x1x1xf32, #tpu.memory_space<vmem>>, vector<1x1x1xf32>,
    } else {
    }
    return
  }
  func.func @transform_0(%arg0: i32, %arg1: i32, %arg2: i32) -> (i32, i32, i32) {
    %c0_i32 = arith.constant 0 : i32
    %c0_i32_0 = arith.constant 0 : i32
    return %arg0, %c0_i32, %arg1 : i32, i32, i32
  }
  func.func @transform_1(%arg0: i32, %arg1: i32, %arg2: i32) -> (i32, i32, i32) {
    %c0_i32 = arith.constant 0 : i32
    %c0_i32_0 = arith.constant 0 : i32
    return %arg0, %arg2, %c0_i32 : i32, i32, i32
  }
  func.func @transform_2(%arg0: i32, %arg1: i32, %arg2: i32) -> (i32, i32, i32) {
    %c0_i32 = arith.constant 0 : i32
    %c0_i32_0 = arith.constant 0 : i32
    %c0_i32_1 = arith.constant 0 : i32
    return %arg0, %c0_i32, %c0_i32_0 : i32, i32, i32
  }
}

</mosaic_0001>

<llo_original>
// kernel: tpu_custom_call.1
$region0: #{tpu_custom_call.1}
  #allocation0 [shape = 'u32[]', space=smem, size = 0x4, offset = 0x4, fixed_abs, tag = 'smem constant byte address 0x4 - core index']
  #allocation1 [shape = 'u32[72,128]{1,0:T(1,128)}', space=vmem, size = 0x9000, scoped, tag = 'internal scratch']
  #allocation2 [shape = 'f32[1,128]{1,0:T(1,128)}', space=vmem, size = 0x200, scoped, tag = 'scratch operand']
  #allocation3 [shape = 'f32[1,128]{1,0:T(1,128)}', space=vmem, size = 0x200, scoped, tag = 'scratch operand']
  %s0 = inlined_call_operand.vmem [shape: f32[2,9,128], index: 0, kind: input, shape index: {}]
  %s1 = inlined_call_operand.vmem [shape: f32[2,64,9], index: 1, kind: input, shape index: {}]
  %s2 = inlined_call_operand.vmem [shape: f32[2,1,1], index: 2, kind: output, shape index: {}]
  %s3 = sld [smem:[#allocation0]]
  $region53: #{tpu_custom_call.1} parent=0
    _
  %s5 = ssub.s32 1, %s3
  %s6 = scalar_select 0, %s5, %s3
  loop: start=0, step=1, limit=4
  $region2: #{tpu_custom_call.1} parent=0 // loop_pre_header
    _
  $region3: #{tpu_custom_call.1} parent=0 // loop_header
    %s8 = sphi 0, %s12
    %p9 = scmp.ge.s32.totalorder %s8, 4
    %s15 = sphi 0, %s34
    %s16 = sphi 0, %s30
    %s17 = sphi 0, %s26
    %s18 = sphi 0, %s15
    %s19 = sphi 0, %s16
    %s20 = sphi 0, %s17
    %s21 = sphi 0, %s18
    %s22 = sphi 0, %s19
    %s23 = sphi 0, %s20
    %s39 = sphi 0, %s41
    %s42 = sphi 0, %s39
    %s43 = sphi 0, %s42
    %s59 = sphi 0, %s43
    %s67 = sphi 0, %s69
    %s70 = sphi 0, %s67
    %s71 = sphi 0, %s70
    %s87 = sphi 0, %s71
    %s93 = sphi 0, %s95
    %s96 = sphi 0, %s93
    %s97 = sphi 0, %s96
    %s113 = sphi 0, %s97
  $region4: #{tpu_custom_call.1} parent=0 // loop_header_branch
    %11 = sbr.rel (%p9) target = $region8
  $region5: #{tpu_custom_call.1} parent=0 // loop_body
    %s13 = ssub.s32 %s8, 1
    %s14 = ssub.s32 %s8, 2
    %s24 = sadd.s32 1, %s17
    %p25 = scmp.ge.s32.totalorder %s24, 1
    %s26 = scalar_select %p25, 0, %s24
    %s27 = sadd.s32 1, %s16
    %s28 = scalar_select %p25, %s27, %s16
    %p29 = scmp.ge.s32.totalorder %s28, 1
    %s30 = scalar_select %p29, 0, %s28
    %s31 = sadd.s32 1, %s15
    %s32 = scalar_select %p29, %s31, %s15
    %p33 = scmp.ge.s32.totalorder %s32, 2
    %s34 = scalar_select %p33, 0, %s32
    %s35 = ssub.s32 %s15, %s34
    %s36 = ssub.s32 %s16, %s30
    %s37 = sor.u32 %s35, %s36
    %p38 = scmp.eq.s32.totalorder %s37, 0
    %s40 = sadd.s32 %s39, 1
    %s41 = scalar_select %p38, %s39, %s40
    %p44 = pneg %p38
    %p45 = scmp.eq.s32.totalorder %s8, 1
    %p46 = por %p44, %p45
    %p47 = scmp.ne.s32.totalorder %s39, %s42
    %p48 = scmp.eq.s32.totalorder %s8, 0
    %p49 = por %p47, %p48
    %p50 = scmp.ne.s32.totalorder %s39, %s42
    %p51 = scmp.eq.s32.totalorder %s13, 1
    %p52 = por %p50, %p51
    %p53 = scmp.ne.s32.totalorder %s42, %s43
    %p54 = scmp.eq.s32.totalorder %s13, 0
    %p55 = por %p53, %p54
    %p56 = scmp.ne.s32.totalorder %s42, %s43
    %p57 = scmp.eq.s32.totalorder %s14, 1
    %p58 = por %p56, %p57
    %p60 = scmp.ne.s32.totalorder %s43, %s59
    %p61 = scmp.eq.s32.totalorder %s14, 0
    %p62 = por %p60, %p61
    %s63 = ssub.s32 %s15, %s34
    %s64 = ssub.s32 %s17, %s26
    %s65 = sor.u32 %s63, %s64
    %p66 = scmp.eq.s32.totalorder %s65, 0
    %s68 = sadd.s32 %s67, 1
    %s69 = scalar_select %p66, %s67, %s68
    %p72 = pneg %p66
    %p73 = scmp.eq.s32.totalorder %s8, 1
    %p74 = por %p72, %p73
    %p75 = scmp.ne.s32.totalorder %s67, %s70
    %p76 = scmp.eq.s32.totalorder %s8, 0
    %p77 = por %p75, %p76
    %p78 = scmp.ne.s32.totalorder %s67, %s70
    %p79 = scmp.eq.s32.totalorder %s13, 1
    %p80 = por %p78, %p79
    %p81 = scmp.ne.s32.totalorder %s70, %s71
    %p82 = scmp.eq.s32.totalorder %s13, 0
    %p83 = por %p81, %p82
    %p84 = scmp.ne.s32.totalorder %s70, %s71
    %p85 = scmp.eq.s32.totalorder %s14, 1
    %p86 = por %p84, %p85
    %p88 = scmp.ne.s32.totalorder %s71, %s87
    %p89 = scmp.eq.s32.totalorder %s14, 0
    %p90 = por %p88, %p89
    %s91 = ssub.s32 %s15, %s34
    %p92 = scmp.eq.s32.totalorder %s91, 0
    %s94 = sadd.s32 %s93, 1
    %s95 = scalar_select %p92, %s93, %s94
    %p98 = pneg %p92
    %p99 = scmp.eq.s32.totalorder %s8, 1
    %p100 = por %p98, %p99
    %p101 = scmp.ne.s32.totalorder %s93, %s96
    %p102 = scmp.eq.s32.totalorder %s8, 0
    %p103 = por %p101, %p102
    %p104 = scmp.ne.s32.totalorder %s93, %s96
    %p105 = scmp.eq.s32.totalorder %s13, 1
    %p106 = por %p104, %p105
    %p107 = scmp.ne.s32.totalorder %s96, %s97
    %p108 = scmp.eq.s32.totalorder %s13, 0
    %p109 = por %p107, %p108
    %p110 = scmp.ne.s32.totalorder %s96, %s97
    %p111 = scmp.eq.s32.totalorder %s14, 1
    %p112 = por %p110, %p111
    %p114 = scmp.ne.s32.totalorder %s97, %s113
    %p115 = scmp.eq.s32.totalorder %s14, 0
    %p116 = por %p114, %p115
    %p117 = scmp.le.s32.totalorder 1, %s8
    %p118 = scmp.lt.s32.totalorder %s8, 3
    %p119 = pnand %p117, %p118
    %p120 = pneg %p119
    // Predicated region
    $region9: #{tpu_custom_call.1} parent=5 // pred_check
      _
    $region10: #{tpu_custom_call.1} parent=5 // pred_check_branch
      %122 = sbr.rel (%p119) target = $region12
    $region11: #{tpu_custom_call.1} parent=5 // pred_region
      %s123 = ssub.s32 %s8, 1
    $region12: #{tpu_custom_call.1} parent=5 // pred_fallthru
      _
    %p124 = scmp.lt.s32.totalorder %s8, 2
    // Predicated region
    $region13: #{tpu_custom_call.1} parent=5 // pred_check
      %p125 = pneg %p124
    $region14: #{tpu_custom_call.1} parent=5 // pred_check_branch
      %127 = sbr.rel (%p125) target = $region16
    $region15: #{tpu_custom_call.1} parent=5 // pred_region
      // Predicated region
      $region17: #{tpu_custom_call.1} parent=15 // pred_check
        %p128 = pneg %p49
      $region18: #{tpu_custom_call.1} parent=15 // pred_check_branch
        %130 = sbr.rel (%p128) target = $region20
      $region19: #{tpu_custom_call.1} parent=15 // pred_region
        %p131 = scmp.lt.s32.totalorder %s15, 1
        %s132 = scalar_select %p131, %s15, 1
        %p133 = scmp.lt.s32.totalorder %s16, 0
        %s134 = scalar_select %p133, %s16, 0
        %s135 = smul.addr %s132, 2
        %s136 = sadd.s32 %s134, %s135
        %s137 = smul.addr %s136, 8
        %s138 = scalar_lea.vmem %s0, %s137
      $region20: #{tpu_custom_call.1} parent=15 // pred_fallthru
        _
      // Predicated region
      $region21: #{tpu_custom_call.1} parent=15 // pred_check
        %p139 = pneg %p77
      $region22: #{tpu_custom_call.1} parent=15 // pred_check_branch
        %141 = sbr.rel (%p139) target = $region24
      $region23: #{tpu_custom_call.1} parent=15 // pred_region
        %s142 = smul.u32 8, %s17
        %p143 = scmp.lt.s32.totalorder %s15, 1
        %s144 = scalar_select %p143, %s15, 1
        %p145 = scmp.lt.s32.totalorder %s142, 7
        %s146 = scalar_select %p145, %s142, 7
        %s147 = smul.addr %s144, 8
        %s148 = sadd.s32 %s146, %s147
        %s149 = smul.addr %s148, 8
        %s150 = scalar_lea.vmem %s1, %s149
        %s151 = smul.u32 8, %s17
      $region24: #{tpu_custom_call.1} parent=15 // pred_fallthru
        _
    $region16: #{tpu_custom_call.1} parent=5 // pred_fallthru
      _
    %p152 = scmp.le.s32.totalorder 1, %s8
    %p153 = scmp.lt.s32.totalorder %s8, 3
    %p154 = pnand %p152, %p153
    %p155 = pneg %p154
    // Predicated region
    $region25: #{tpu_custom_call.1} parent=5 // pred_check
      _
    $region26: #{tpu_custom_call.1} parent=5 // pred_check_branch
      %157 = sbr.rel (%p154) target = $region28
    $region27: #{tpu_custom_call.1} parent=5 // pred_region
      %s158 = ssub.s32 %s8, 1
      %p159 = scmp.lt.s32.totalorder %s18, 1
      %s160 = scalar_select %p159, %s18, 1
      %p161 = scmp.lt.s32.totalorder %s19, 0
      %s162 = scalar_select %p161, %s19, 0
      %s163 = smul.addr %s160, 2
      %s164 = sadd.s32 %s162, %s163
      %s165 = smul.addr %s164, 8
      %s166 = scalar_lea.vmem %s0, %s165
      %p167 = pneg %p55
      %p168 = pneg %p52
      %s169 = smul.u32 8, %s20
      %p170 = scmp.lt.s32.totalorder %s18, 1
      %s171 = scalar_select %p170, %s18, 1
      %p172 = scmp.lt.s32.totalorder %s169, 7
      %s173 = scalar_select %p172, %s169, 7
      %s174 = smul.addr %s171, 8
      %s175 = sadd.s32 %s173, %s174
      %s176 = smul.addr %s175, 8
      %s177 = scalar_lea.vmem %s1, %s176
      %p178 = pneg %p83
      %p179 = pneg %p80
      %p180 = pneg %p109
      %p181 = pneg %p106
      %p182 = scmp.lt.s32.totalorder %s18, 1
      %s183 = scalar_select %p182, %s18, 1
      %s184 = scalar_lea.vmem %s2, %s183
      %p185 = scmp.lt.s32.totalorder %s18, 1
      %s186 = scalar_select %p185, %s18, 1
      %p187 = scmp.lt.s32.totalorder %s19, 0
      %s188 = scalar_select %p187, %s19, 0
      %s189 = smul.addr %s186, 2
      %s190 = sadd.s32 %s188, %s189
      %s191 = smul.addr %s190, 8
      %s192 = scalar_lea.vmem %s0, %s191
      %s193 = smul.u32 8, %s20
      %p194 = scmp.lt.s32.totalorder %s18, 1
      %s195 = scalar_select %p194, %s18, 1
      %p196 = scmp.lt.s32.totalorder %s193, 7
      %s197 = scalar_select %p196, %s193, 7
      %s198 = smul.addr %s195, 8
      %s199 = sadd.s32 %s197, %s198
      %s200 = smul.addr %s199, 8
      %s201 = scalar_lea.vmem %s1, %s200
      %s202 = smul.u32 8, %s20
      %p203 = scmp.lt.s32.totalorder %s18, 1
      %s204 = scalar_select %p203, %s18, 1
      %s205 = scalar_lea.vmem %s2, %s204
      %v206 = vld [vmem:[%s192] sm:$0xff]
      %v207 = vld [vmem:[%s192 + $0x8] sm:$0x1]
      %v208 = vld [vmem:[%s201] sm:$0xff]
      %v209 = vld [vmem:[%s201 + $0x8] sm:$0xff]
      %v210 = vld [vmem:[%s201 + $0x10] sm:$0xff]
      %v211 = vld [vmem:[%s201 + $0x18] sm:$0xff]
      %v212 = vld [vmem:[%s201 + $0x20] sm:$0xff]
      %v213 = vld [vmem:[%s201 + $0x28] sm:$0xff]
      %v214 = vld [vmem:[%s201 + $0x30] sm:$0xff]
      %v215 = vld [vmem:[%s201 + $0x38] sm:$0xff]
      %vm216 = vcmask 39936
      %v218 = vsel %vm216, %v208, 0
      %v221 = vsel %vm216, %v209, 0
      %v224 = vsel %vm216, %v210, 0
      %v227 = vsel %vm216, %v211, 0
      %v230 = vsel %vm216, %v212, 0
      %v233 = vsel %vm216, %v213, 0
      %v236 = vsel %vm216, %v214, 0
      %v239 = vsel %vm216, %v215, 0
      %vm241 = vcmask 1044480
      %v243 = vsel %vm241, %v206, 0
      %245 = vmatpush.msra.mxu0 0.0
      %246 = vmatpush.msra.mxu0 0.0
      %247 = vmatpush.msra.mxu0 0.0
      %248 = vmatpush.msra.mxu0 0.0
      %249 = vmatpush.msra.mxu0 0.0
      %250 = vmatpush.msra.mxu0 0.0
      %251 = vmatpush.msra.mxu0 0.0
      %252 = vmatpush.msra.mxu0 0.0
      %253 = vmatpush.msra.mxu0 0.0
      %254 = vmatpush.msra.mxu0 0.0
      %255 = vmatpush.msra.mxu0 0.0
      %256 = vmatpush.msra.mxu0 0.0
      %257 = vmatpush.msra.mxu0 0.0
      %258 = vmatpush.msra.mxu0 0.0
      %259 = vmatpush.msra.mxu0 0.0
      %260 = vmatpush.msra.mxu0 %v243
      %261 = vmatmul.f32.gmra.mxu0 %v218
      %v262 = vpop.f32.mrf.mxu0
      %v263 = vadd.f32 0.0, %v262
      %264 = vmatmul.f32.gmra.mxu0 %v221
      %v265 = vpop.f32.mrf.mxu0
      %v266 = vadd.f32 0.0, %v265
      %267 = vmatmul.f32.gmra.mxu0 %v224
      %v268 = vpop.f32.mrf.mxu0
      %v269 = vadd.f32 0.0, %v268
      %270 = vmatmul.f32.gmra.mxu0 %v227
      %v271 = vpop.f32.mrf.mxu0
      %v272 = vadd.f32 0.0, %v271
      %273 = vmatmul.f32.gmra.mxu0 %v230
      %v274 = vpop.f32.mrf.mxu0
      %v275 = vadd.f32 0.0, %v274
      %276 = vmatmul.f32.gmra.mxu0 %v233
      %v277 = vpop.f32.mrf.mxu0
      %v278 = vadd.f32 0.0, %v277
      %279 = vmatmul.f32.gmra.mxu0 %v236
      %v280 = vpop.f32.mrf.mxu0
      %v281 = vadd.f32 0.0, %v280
      %282 = vmatmul.f32.gmra.mxu0 %v239
      %v283 = vpop.f32.mrf.mxu0
      %v284 = vadd.f32 0.0, %v283
      %285 = vdwg.mxu0
      %286 = vrot.lane.b32.xlu0 %v208, 123
      %v287 = vpop.permute.xlu0 %286
      %288 = vrot.lane.b32.xlu0 %v209, 123
      %v289 = vpop.permute.xlu0 %288
      %290 = vrot.lane.b32.xlu0 %v210, 123
      %v291 = vpop.permute.xlu0 %290
      %292 = vrot.lane.b32.xlu0 %v211, 123
      %v293 = vpop.permute.xlu0 %292
      %294 = vrot.lane.b32.xlu0 %v212, 123
      %v295 = vpop.permute.xlu0 %294
      %296 = vrot.lane.b32.xlu0 %v213, 123
      %v297 = vpop.permute.xlu0 %296
      %298 = vrot.lane.b32.xlu0 %v214, 123
      %v299 = vpop.permute.xlu0 %298
      %300 = vrot.lane.b32.xlu0 %v215, 123
      %v301 = vpop.permute.xlu0 %300
      %vm303 = vcmask 1042432
      %v304 = vrot.slane %v206, 5
      %v305 = vrot.slane %v207, 5
      %v306 = vsel %vm303, %v304, %v305
      %vm307 = vcmask 31744
      %v308 = vsel %vm307, %v287, 0
      %v310 = vsel %vm307, %v289, 0
      %v312 = vsel %vm307, %v291, 0
      %v314 = vsel %vm307, %v293, 0
      %v316 = vsel %vm307, %v295, 0
      %v318 = vsel %vm307, %v297, 0
      %v320 = vsel %vm307, %v299, 0
      %v322 = vsel %vm307, %v301, 0
      %vm324 = vcmask 1043456
      %v325 = vsel %vm324, %v306, 0
      %327 = vmatpush.msra.mxu0 0.0
      %328 = vmatpush.msra.mxu0 0.0
      %329 = vmatpush.msra.mxu0 0.0
      %330 = vmatpush.msra.mxu0 0.0
      %331 = vmatpush.msra.mxu0 0.0
      %332 = vmatpush.msra.mxu0 0.0
      %333 = vmatpush.msra.mxu0 0.0
      %334 = vmatpush.msra.mxu0 0.0
      %335 = vmatpush.msra.mxu0 0.0
      %336 = vmatpush.msra.mxu0 0.0
      %337 = vmatpush.msra.mxu0 0.0
      %338 = vmatpush.msra.mxu0 0.0
      %339 = vmatpush.msra.mxu0 0.0
      %340 = vmatpush.msra.mxu0 0.0
      %341 = vmatpush.msra.mxu0 0.0
      %342 = vmatpush.msra.mxu0 %v325
      %343 = vmatmul.f32.gmra.mxu0 %v308
      %v344 = vpop.f32.mrf.mxu0
      %v345 = vadd.f32 0.0, %v344
      %346 = vmatmul.f32.gmra.mxu0 %v310
      %v347 = vpop.f32.mrf.mxu0
      %v348 = vadd.f32 0.0, %v347
      %349 = vmatmul.f32.gmra.mxu0 %v312
      %v350 = vpop.f32.mrf.mxu0
      %v351 = vadd.f32 0.0, %v350
      %352 = vmatmul.f32.gmra.mxu0 %v314
      %v353 = vpop.f32.mrf.mxu0
      %v354 = vadd.f32 0.0, %v353
      %355 = vmatmul.f32.gmra.mxu0 %v316
      %v356 = vpop.f32.mrf.mxu0
      %v357 = vadd.f32 0.0, %v356
      %358 = vmatmul.f32.gmra.mxu0 %v318
      %v359 = vpop.f32.mrf.mxu0
      %v360 = vadd.f32 0.0, %v359
      %361 = vmatmul.f32.gmra.mxu0 %v320
      %v362 = vpop.f32.mrf.mxu0
      %v363 = vadd.f32 0.0, %v362
      %364 = vmatmul.f32.gmra.mxu0 %v322
      %v365 = vpop.f32.mrf.mxu0
      %v366 = vadd.f32 0.0, %v365
      %367 = vdwg.mxu0
      %v368 = vsub.f32 0.1, %v345
      %v369 = vsub.f32 0.1, %v348
      %v370 = vsub.f32 0.1, %v351
      %v371 = vsub.f32 0.1, %v354
      %v372 = vsub.f32 0.1, %v357
      %v373 = vsub.f32 0.1, %v360
      %v374 = vsub.f32 0.1, %v363
      %v375 = vsub.f32 0.1, %v366
      %v376 = vmax.f32 %v368, 0.0
      %v377 = vmax.f32 %v369, 0.0
      %v378 = vmax.f32 %v370, 0.0
      %v379 = vmax.f32 %v371, 0.0
      %v380 = vmax.f32 %v372, 0.0
      %v381 = vmax.f32 %v373, 0.0
      %v382 = vmax.f32 %v374, 0.0
      %v383 = vmax.f32 %v375, 0.0
      %v384 = vmul.f32 %v376, %v376
      %v385 = vmul.f32 %v377, %v377
      %v386 = vmul.f32 %v378, %v378
      %v387 = vmul.f32 %v379, %v379
      %v388 = vmul.f32 %v380, %v380
      %v389 = vmul.f32 %v381, %v381
      %v390 = vmul.f32 %v382, %v382
      %v391 = vmul.f32 %v383, %v383
      %v392 = vmul.f32 %v384, %v376
      %v393 = vmul.f32 %v385, %v377
      %v394 = vmul.f32 %v386, %v378
      %v395 = vmul.f32 %v387, %v379
      %v396 = vmul.f32 %v388, %v380
      %v397 = vmul.f32 %v389, %v381
      %v398 = vmul.f32 %v390, %v382
      %v399 = vmul.f32 %v391, %v383
      %v400 = vmin.f32 %v263, %v275
      %v401 = vmin.f32 %v266, %v278
      %v402 = vmin.f32 %v269, %v281
      %v403 = vmin.f32 %v272, %v284
      %v404 = vmin.f32 %v400, %v401
      %v405 = vmin.f32 %v402, %v403
      %v406 = vmin.f32 %v404, %v405
      %v407 = vrot.slane %v406, 4
      %v408 = vmin.f32 %v406, %v407
      %v409 = vrot.slane %v408, 2
      %v410 = vmin.f32 %v408, %v409
      %v411 = vrot.slane %v410, 1
      %v412 = vmin.f32 %v410, %v411
      %vm413 = vcmp.le.f32.partialorder %v263, %v412
      %vm414 = vcmp.le.f32.partialorder %v266, %v412
      %vm415 = vcmp.le.f32.partialorder %v269, %v412
      %vm416 = vcmp.le.f32.partialorder %v272, %v412
      %vm417 = vcmp.le.f32.partialorder %v275, %v412
      %vm418 = vcmp.le.f32.partialorder %v278, %v412
      %vm419 = vcmp.le.f32.partialorder %v281, %v412
      %vm420 = vcmp.le.f32.partialorder %v284, %v412
      %v421 = vsel %vm413, %v392, 0.0
      %v422 = vsel %vm414, %v393, 0.0
      %v423 = vsel %vm415, %v394, 0.0
      %v424 = vsel %vm416, %v395, 0.0
      %v425 = vsel %vm417, %v396, 0.0
      %v426 = vsel %vm418, %v397, 0.0
      %v427 = vsel %vm419, %v398, 0.0
      %v428 = vsel %vm420, %v399, 0.0
      %v429 = vadd.f32 %v421, %v422
      %v430 = vadd.f32 %v429, %v423
      %v431 = vadd.f32 %v430, %v424
      %v432 = vadd.f32 %v431, %v425
      %v433 = vadd.f32 %v432, %v426
      %v434 = vadd.f32 %v433, %v427
      %v435 = vadd.f32 %v434, %v428
      %v436 = vrot.slane %v435, 4
      %v437 = vadd.f32 %v435, %v436
      %v438 = vrot.slane %v437, 2
      %v439 = vadd.f32 %v437, %v438
      %v440 = vrot.slane %v439, 1
      %v441 = vadd.f32 %v439, %v440
      %p442 = scmp.eq.s32.totalorder %s20, 0
      // Predicated region
      $region29: #{tpu_custom_call.1} parent=27 // pred_check
        %p443 = pneg %p442
      $region30: #{tpu_custom_call.1} parent=27 // pred_check_branch
        %445 = sbr.rel (%p443) target = $region32
      $region31: #{tpu_custom_call.1} parent=27 // pred_region
        %446 = vst [vmem:[#allocation2] sm:$0x1] inf
        %447 = vst [vmem:[#allocation3] sm:$0x1] 0.0
      $region32: #{tpu_custom_call.1} parent=27 // pred_fallthru
        _
      %p448 = scmp.eq.s32.totalorder %s19, 0
      %p449 = pnand %p448, %p442
      %p450 = pneg %p449
      // Predicated region
      $region33: #{tpu_custom_call.1} parent=27 // pred_check
        _
      $region34: #{tpu_custom_call.1} parent=27 // pred_check_branch
        %452 = sbr.rel (%p449) target = $region36
      $region35: #{tpu_custom_call.1} parent=27 // pred_region
        %vm453 = vcmask 0
        %454 = vst.msk [vmem:[%s205] sm:$0x1] %vm453, 0.0
      $region36: #{tpu_custom_call.1} parent=27 // pred_fallthru
        _
      %v455 = vld [vmem:[#allocation2] sm:$0x1]
      %v456 = vld [vmem:[#allocation3] sm:$0x1]
      %vm457 = vcmp.lt.f32.partialorder %v412, %v455
      %vm458 = vcmp.eq.f32.partialorder %v412, %v455
      %v459 = vadd.f32 %v456, %v441
      %v460 = vsel %vm458, %v459, %v456
      %v461 = vsel %vm457, %v441, %v460
      %v462 = vmin.f32 %v455, %v412
      %463 = vst [vmem:[#allocation2] sm:$0x1] %v462
      %464 = vst [vmem:[#allocation3] sm:$0x1] %v461
      // Predicated region
      $region37: #{tpu_custom_call.1} parent=27 // pred_check
        %p465 = pneg %p442
      $region38: #{tpu_custom_call.1} parent=27 // pred_check_branch
        %467 = sbr.rel (%p465) target = $region40
      $region39: #{tpu_custom_call.1} parent=27 // pred_region
        %v468 = vld [vmem:[#allocation2] sm:$0x1]
        %vm469 = vcmp.le.f32.partialorder %v468, 0.25
        %v470 = vld [vmem:[#allocation3] sm:$0x1]
        %v471 = vsel %vm469, %v470, 0.0
        %v472 = vld [vmem:[%s205] sm:$0x1]
        %vm473 = vcmask 1040384
        %v474 = vsel %vm473, %v471, 0.0
        %475 = vadd.xlane.f32.xlu0 %v474
        %v476 = vpop.xlane.xlu0 %475
        %v477 = vadd.f32 %v472, %v476
        %vm478 = vcmask 0
        %479 = vst.msk [vmem:[%s205] sm:$0x1] %vm478, %v477
      $region40: #{tpu_custom_call.1} parent=27 // pred_fallthru
        _
      %p480 = scmp.lt.s32.totalorder %s18, 1
      %s481 = scalar_select %p480, %s18, 1
      %s482 = scalar_lea.vmem %s2, %s481
      // Predicated region
      $region41: #{tpu_custom_call.1} parent=27 // pred_check
        %p483 = pneg %p106
      $region42: #{tpu_custom_call.1} parent=27 // pred_check_branch
        %485 = sbr.rel (%p483) target = $region44
      $region43: #{tpu_custom_call.1} parent=27 // pred_region
        _
      $region44: #{tpu_custom_call.1} parent=27 // pred_fallthru
        _
    $region28: #{tpu_custom_call.1} parent=5 // pred_fallthru
      _
    %p486 = scmp.le.s32.totalorder 2, %s8
    // Predicated region
    $region45: #{tpu_custom_call.1} parent=5 // pred_check
      %p487 = pneg %p486
    $region46: #{tpu_custom_call.1} parent=5 // pred_check_branch
      %489 = sbr.rel (%p487) target = $region48
    $region47: #{tpu_custom_call.1} parent=5 // pred_region
      %s490 = ssub.s32 %s8, 2
      // Predicated region
      $region49: #{tpu_custom_call.1} parent=47 // pred_check
        %p491 = pneg %p112
      $region50: #{tpu_custom_call.1} parent=47 // pred_check_branch
        %493 = sbr.rel (%p491) target = $region52
      $region51: #{tpu_custom_call.1} parent=47 // pred_region
        %p494 = scmp.lt.s32.totalorder %s21, 1
        %s495 = scalar_select %p494, %s21, 1
        %s496 = scalar_lea.vmem %s2, %s495
      $region52: #{tpu_custom_call.1} parent=47 // pred_fallthru
        _
    $region48: #{tpu_custom_call.1} parent=5 // pred_fallthru
      _
  $region6: #{tpu_custom_call.1} parent=0 // loop_footer
    %s12 = sadd.s32 1, %s8
  $region7: #{tpu_custom_call.1} parent=0 // loop_footer_branch
    %7 = sbr.rel target = $region3
  $region8: #{tpu_custom_call.1} parent=0 // loop_exit
    _

</llo_original>
